<compile_context>
chip_gen: v6e
topology: v6e:2x2x1
jax: 0.10.0
libtpu: 0.0.40
codegen_flags: <defaults>
</compile_context>

<pallas_src>
import math

import jax
import jax.numpy as jnp
from jax.experimental import pallas as pl
from jax.experimental.pallas import tpu as pltpu


def _token_embedding_kernel(ids_ref,   # SMEM (scalar prefetch): (n_pad,) int32 token ids
                            emb_hbm,   # HBM ref (pl.ANY): (V, D) embedding table
                            out_ref,   # VMEM output block: (tile_n, D)
                            sem):      # DMA semaphore
    tile_n, d = out_ref.shape
    base = pl.program_id(0) * tile_n

    # Issue one row-gather DMA per token in this tile, landing directly in the
    # output block (no intermediate VMEM scratch buffer).
    @pl.loop(0, tile_n)
    def _(i):
        tok = ids_ref[base + i]
        pltpu.make_async_copy(emb_hbm.at[tok], out_ref.at[i], sem).start()

    # Retire them (each wait accounts for exactly one row-sized transfer).
    @pl.loop(0, tile_n)
    def _(i):
        pltpu.make_async_copy(emb_hbm.at[0], out_ref.at[i], sem).wait()

    # Fused sqrt(d_embed) scale: one in-place VPU pass over the gathered tile.
    scale = jnp.float32(math.sqrt(d))
    out_ref[...] = (out_ref[...].astype(jnp.float32) * scale).astype(out_ref.dtype)


def token_embedding(x, emb_weight, *, tile_n=256):
    """x: (batch, seq) integer token ids; emb_weight: (vocab, d_embed)."""
    orig_shape = x.shape
    v, d = emb_weight.shape
    n = 1
    for s in orig_shape:
        n *= int(s)

    # Tokens per grid step: keep it a multiple of 8 (sublane), clamp for tiny
    # inputs, default 256 to amortize per-step overhead.
    tile = max(8, min(tile_n, ((n + 7) // 8) * 8))
    n_pad = ((n + tile - 1) // tile) * tile

    ids = jnp.pad(x.reshape(n).astype(jnp.int32), (0, n_pad - n))

    out = pl.pallas_call(
        _token_embedding_kernel,
        out_shape=jax.ShapeDtypeStruct((n_pad, d), emb_weight.dtype),
        grid_spec=pltpu.PrefetchScalarGridSpec(
            num_scalar_prefetch=1,                     # ids -> SMEM
            grid=(n_pad // tile,),
            in_specs=[
                pl.BlockSpec(memory_space=pl.ANY),     # table stays in HBM
            ],
            out_specs=pl.BlockSpec((tile, d), lambda i, ids: (i, 0)),
            scratch_shapes=[
                pltpu.SemaphoreType.DMA(()),           # row-DMA semaphore
            ],
        ),
        compiler_params=pltpu.CompilerParams(
            dimension_semantics=("parallel",)),
    )(ids, emb_weight)

    return out[:n].reshape(*orig_shape, d)


if __name__ == "__main__":
    key = jax.random.PRNGKey(0)
    k_emb, k_ids = jax.random.split(key)

    d_embed = 32
    vocab_size = 64
    batch, seq = 2, 8

    # nn.Embedding default init: N(0, 1)
    emb_weight = jax.random.normal(k_emb, (vocab_size, d_embed), dtype=jnp.float32)
    x = jax.random.randint(k_ids, (batch, seq), 0, vocab_size, dtype=jnp.int32)

    out = token_embedding(x, emb_weight)
    out = jax.block_until_ready(out)

    # Reference check (plain JAX gather + scale)
    ref = jnp.take(emb_weight, x, axis=0) * jnp.float32(math.sqrt(d_embed))
    assert out.shape == (batch, seq, d_embed)
    assert jnp.allclose(out, ref, atol=1e-5, rtol=1e-5)

    print("KERNEL_OK")
</pallas_src>

<mosaic_0001>
module attributes {stable_mosaic.version = 11 : i64} {
  func.func @_token_embedding_kernel(%arg0: i32, %arg1: memref<16xi32, #tpu.memory_space<smem>>, %arg2: memref<64x32xf32, #tpu.memory_space<any>>, %arg3: memref<16x32xf32, #tpu.memory_space<vmem>>, %arg4: memref<!tpu.dma_semaphore, #tpu.memory_space<semaphore_mem>>) attributes {dimension_semantics = [#tpu.dimension_semantics<parallel>], iteration_bounds = array<i64: 1>, scalar_prefetch = 1 : i64, scratch_operands = 1 : i64, tpu.core_type = #tpu.core_type<tc>, window_params = [{}, {transform_indices = @transform_1, window_bounds = array<i64: 16, 32>}]} {
    %c16_i32 = arith.constant 16 : i32
    %0 = arith.muli %arg0, %c16_i32 : i32
    %c0_i32 = arith.constant 0 : i32
    %c16_i32_0 = arith.constant 16 : i32
    %1 = arith.addi %c0_i32, %c16_i32_0 : i32
    %c1_i32 = arith.constant 1 : i32
    scf.for %arg5 = %c0_i32 to %1 step %c1_i32  : i32 {
      %c1_i32_9 = arith.constant 1 : i32
      %7 = arith.muli %arg5, %c1_i32_9 : i32
      %c0_i32_10 = arith.constant 0 : i32
      %8 = arith.addi %c0_i32_10, %7 : i32
      %9 = arith.addi %0, %8 : i32
      %10 = arith.index_cast %9 : i32 to index
      %11 = memref.load %arg1[%10] : memref<16xi32, #tpu.memory_space<smem>>
      %c0_i32_11 = arith.constant 0 : i32
      %12 = tpu.memref_slice %arg2[%11, %c0_i32_11] : memref<64x32xf32, #tpu.memory_space<any>> -> memref<1x32xf32, #tpu.memory_space<any>>
      %13 = tpu.memref_squeeze %12 : memref<1x32xf32, #tpu.memory_space<any>> -> memref<32xf32, #tpu.memory_space<any>>
      %c0_i32_12 = arith.constant 0 : i32
      %14 = tpu.memref_slice %arg3[%8, %c0_i32_12] : memref<16x32xf32, #tpu.memory_space<vmem>> -> memref<1x32xf32, #tpu.memory_space<vmem>>
      %15 = tpu.memref_squeeze %14 : memref<1x32xf32, #tpu.memory_space<vmem>> -> memref<32xf32, #tpu.memory_space<vmem>>
      tpu.enqueue_dma source(%13 : memref<32xf32, #tpu.memory_space<any>>) target(%15 : memref<32xf32, #tpu.memory_space<vmem>>) target_semaphore(%arg4 : memref<!tpu.dma_semaphore, #tpu.memory_space<semaphore_mem>>)
    }
    %c16_i32_1 = arith.constant 16 : i32
    %c0_i32_2 = arith.constant 0 : i32
    %c16_i32_3 = arith.constant 16 : i32
    %2 = arith.addi %c0_i32_2, %c16_i32_3 : i32
    %c1_i32_4 = arith.constant 1 : i32
    scf.for %arg5 = %c0_i32_2 to %2 step %c1_i32_4  : i32 {
      %c1_i32_9 = arith.constant 1 : i32
      %7 = arith.muli %arg5, %c1_i32_9 : i32
      %c0_i32_10 = arith.constant 0 : i32
      %8 = arith.addi %c0_i32_10, %7 : i32
      %c0_i32_11 = arith.constant 0 : i32
      %c0_i32_12 = arith.constant 0 : i32
      %9 = tpu.memref_slice %arg2[%c0_i32_11, %c0_i32_12] : memref<64x32xf32, #tpu.memory_space<any>> -> memref<1x32xf32, #tpu.memory_space<any>>
      %10 = tpu.memref_squeeze %9 : memref<1x32xf32, #tpu.memory_space<any>> -> memref<32xf32, #tpu.memory_space<any>>
      %c0_i32_13 = arith.constant 0 : i32
      %11 = tpu.memref_slice %arg3[%8, %c0_i32_13] : memref<16x32xf32, #tpu.memory_space<vmem>> -> memref<1x32xf32, #tpu.memory_space<vmem>>
      %12 = tpu.memref_squeeze %11 : memref<1x32xf32, #tpu.memory_space<vmem>> -> memref<32xf32, #tpu.memory_space<vmem>>
      tpu.wait_dma2 semaphore(%arg4 : memref<!tpu.dma_semaphore, #tpu.memory_space<semaphore_mem>>) src(%10 : memref<32xf32, #tpu.memory_space<any>>) dst(%12 : memref<32xf32, #tpu.memory_space<vmem>>)
    }
    %c16_i32_5 = arith.constant 16 : i32
    %c0 = arith.constant 0 : index
    %c0_6 = arith.constant 0 : index
    %3 = vector.load %arg3[%c0, %c0_6] : memref<16x32xf32, #tpu.memory_space<vmem>>, vector<16x32xf32>
    %cst = arith.constant 5.65685415 : f32
    %4 = vector.broadcast %cst : f32 to vector<16x32xf32>
    %5 = arith.mulf %3, %4 : vector<16x32xf32>
    %c0_7 = arith.constant 0 : index
    %c0_8 = arith.constant 0 : index
    %6 = vector.load %arg3[%c0_7, %c0_8] : memref<16x32xf32, #tpu.memory_space<vmem>>, vector<16x32xf32>
    tpu.vector_store %arg3[%c0_7, %c0_8], %5 {strides = array<i32>} : memref<16x32xf32, #tpu.memory_space<vmem>>, vector<16x32xf32>,
    return
  }
  func.func @transform_1(%arg0: i32, %arg1: memref<16xi32, #tpu.memory_space<smem>>) -> (i32, i32) {
    %c0_i32 = arith.constant 0 : i32
    %c0_i32_0 = arith.constant 0 : i32
    return %arg0, %c0_i32 : i32, i32
  }
}

</mosaic_0001>

<llo_original>
// kernel: tpu_custom_call.1
$region0: #{tpu_custom_call.1}
  #allocation0 [shape = 'u32[]', space=smem, size = 0x4, offset = 0x4, fixed_abs, tag = 'smem constant byte address 0x4 - core index']
  #allocation1 [shape = 'u32[144,128]{1,0:T(1,128)}', space=vmem, size = 0x12000, scoped, tag = 'internal scratch']
  #allocation2 [shape = 's32[1]{0}', space=sflag, size = 0x4, scoped, tag = 'scratch operand']
  #allocation3 [shape = 's32[1]{0}', space=sflag, size = 0x4, scoped, tag = 'scoped memory for tpu_custom_call.1']
  #allocation4 [shape = 'u8[512]{0}', space=smem, size = 0x200, scoped, tag = 'prefetched SMEM operand 0']
  #allocation7 [shape = 's32[]', space=sflag, size = 0x4, offset = 0, fixed_abs, tag = 'sflag constant byte address 0x0 - dummy sync flag']
  %s0 = inlined_call_operand.vmem [shape: s32[16], index: 0, kind: input, shape index: {}]
  %s1 = inlined_call_operand.vmem [shape: f32[64,32], index: 1, kind: input, shape index: {}]
  %s2 = inlined_call_operand.hbm [shape: f32[16,32], index: 2, kind: output, shape index: {}]
  %s3 = sld [smem:[#allocation0]]
  $region54: #{tpu_custom_call.1} parent=0
    _
  %s5 = ssub.s32 1, %s3
  %s6 = scalar_select 0, %s5, %s3
  %s7 = sshll.u32 %s0, 4
  %s8 = int_to_ptr.vmem [resolvable:$true] %s7
  %10 = dma.vmem_to_smem %s8, 16, [#allocation4], [#allocation3]
  %11 = dma.done [#allocation3], 16
  %12 = sfence
  $region1: #{tpu_custom_call.1} parent=0
    #allocation5 [shape = 'u8[8192]{0}', space=vmem, size = 0x2000, scoped, tag = 'output window, operand 0, single buffered']
    #allocation6 [shape = 's32[1]{0}', space=sflag, size = 0x4, scoped, tag = 'scoped memory for tpu_custom_call.1']
    %13 = vsyncpa [#allocation6], 0
    %s14 = smul.u32 0, 16
    loop: start=0, step=1, limit=16
    $region2: #{tpu_custom_call.1} parent=1 // loop_pre_header
      _
    $region3: #{tpu_custom_call.1} parent=1 // loop_header
      %s16 = sphi 0, %s20
      %p17 = scmp.ge.s32.totalorder %s16, 16
    $region4: #{tpu_custom_call.1} parent=1 // loop_header_branch
      %19 = sbr.rel (%p17) target = $region8
    $region5: #{tpu_custom_call.1} parent=1 // loop_body
      %s21 = sadd.s32 %s14, %s16
      %s22 = sld [smem:[#allocation4 + %s21]]
      %s23 = scalar_lea.vmem %s1, %s22
      %s24 = scalar_lea.vmem [#allocation5], %s16
      %p26 = scmp.lt.u32.totalorder 1, 8
      %p27 = pneg %p26
      // Predicated region
      $region9: #{tpu_custom_call.1} parent=5 // pred_check
        _
      $region10: #{tpu_custom_call.1} parent=5 // pred_check_branch
        %29 = sbr.rel (%p26) target = $region12
      $region11: #{tpu_custom_call.1} parent=5 // pred_region
        %s45 = sand.u32 1, 7
        %p46 = scmp.eq.s32.totalorder %s45, 0
        %p47 = pneg %p46
        // Predicated region
        $region24: #{tpu_custom_call.1} parent=11 // pred_check
          _
        $region25: #{tpu_custom_call.1} parent=11 // pred_check_branch
          %49 = sbr.rel (%p46) target = $region27
        $region26: #{tpu_custom_call.1} parent=11 // pred_region
          %s50 = sand.u32 1, 7
          %s51 = ssub.s32 1, %s50
          %s52 = scalar_lea.vmem %s23, %s51
          %s53 = ssub.s32 1, %s50
          %s54 = scalar_lea.vmem %s24, %s53 [#allocation5]
          %s55 = sshll.u32 1, %s50
          %s56 = ssub.s32 %s55, 1
          loop: start=0, step=1, limit=1
          $region28: #{tpu_custom_call.1} parent=26 // loop_pre_header
            _
          $region29: #{tpu_custom_call.1} parent=26 // loop_header
            %s58 = sphi 0, %s62
            %p59 = scmp.ge.s32.totalorder %s58, 1
            %s63 = sphi %s52, %s52
            %s64 = sphi %s54, %s54
          $region30: #{tpu_custom_call.1} parent=26 // loop_header_branch
            %61 = sbr.rel (%p59) target = $region34
          $region31: #{tpu_custom_call.1} parent=26 // loop_body
            %v65 = vld [vmem:[%s63] sm:%s56]
            %66 = vst [vmem:[%s64] sm:%s56] %v65
          $region32: #{tpu_custom_call.1} parent=26 // loop_footer
            %s62 = sadd.s32 1, %s58
          $region33: #{tpu_custom_call.1} parent=26 // loop_footer_branch
            %57 = sbr.rel target = $region29
          $region34: #{tpu_custom_call.1} parent=26 // loop_exit
            _
        $region27: #{tpu_custom_call.1} parent=11 // pred_fallthru
          _
      $region12: #{tpu_custom_call.1} parent=5 // pred_fallthru
        _
      // Predicated region
      $region13: #{tpu_custom_call.1} parent=5 // pred_check
        %p30 = pneg %p26
      $region14: #{tpu_custom_call.1} parent=5 // pred_check_branch
        %32 = sbr.rel (%p30) target = $region16
      $region15: #{tpu_custom_call.1} parent=5 // pred_region
        %s33 = sshll.u32 1, 1
        %s34 = ssub.s32 %s33, 1
        loop: start=0, step=1, limit=1
        $region17: #{tpu_custom_call.1} parent=15 // loop_pre_header
          _
        $region18: #{tpu_custom_call.1} parent=15 // loop_header
          %s36 = sphi 0, %s40
          %p37 = scmp.ge.s32.totalorder %s36, 1
          %s41 = sphi %s23, %s23
          %s42 = sphi %s24, %s24
        $region19: #{tpu_custom_call.1} parent=15 // loop_header_branch
          %39 = sbr.rel (%p37) target = $region23
        $region20: #{tpu_custom_call.1} parent=15 // loop_body
          %v43 = vld [vmem:[%s41] sm:%s34]
          %44 = vst [vmem:[%s42] sm:%s34] %v43
        $region21: #{tpu_custom_call.1} parent=15 // loop_footer
          %s40 = sadd.s32 1, %s36
        $region22: #{tpu_custom_call.1} parent=15 // loop_footer_branch
          %35 = sbr.rel target = $region18
        $region23: #{tpu_custom_call.1} parent=15 // loop_exit
          _
      $region16: #{tpu_custom_call.1} parent=5 // pred_fallthru
        _
      // Predicated region
      $region35: #{tpu_custom_call.1} parent=5 // pred_check
        _
      $region36: #{tpu_custom_call.1} parent=5 // pred_check_branch
        %69 = sbr.rel (0) target = $region38
      $region37: #{tpu_custom_call.1} parent=5 // pred_region
        %70 = vsyncadd [#allocation2], 16
      $region38: #{tpu_custom_call.1} parent=5 // pred_fallthru
        _
    $region6: #{tpu_custom_call.1} parent=1 // loop_footer
      %s20 = sadd.s32 1, %s16
    $region7: #{tpu_custom_call.1} parent=1 // loop_footer_branch
      %15 = sbr.rel target = $region3
    $region8: #{tpu_custom_call.1} parent=1 // loop_exit
      _
    loop: start=0, step=1, limit=16
    $region39: #{tpu_custom_call.1} parent=1 // loop_pre_header
      _
    $region40: #{tpu_custom_call.1} parent=1 // loop_header
      %s72 = sphi 0, %s76
      %p73 = scmp.ge.s32.totalorder %s72, 16
    $region41: #{tpu_custom_call.1} parent=1 // loop_header_branch
      %75 = sbr.rel (%p73) target = $region45
    $region42: #{tpu_custom_call.1} parent=1 // loop_body
      %78 = dma.done [#allocation2], 16
    $region43: #{tpu_custom_call.1} parent=1 // loop_footer
      %s76 = sadd.s32 1, %s72
    $region44: #{tpu_custom_call.1} parent=1 // loop_footer_branch
      %71 = sbr.rel target = $region40
    $region45: #{tpu_custom_call.1} parent=1 // loop_exit
      _
    %v79 = vld [vmem:[#allocation5] sm:$0xff]
    %v80 = vld [vmem:[#allocation5 + $0x8] sm:$0xff]
    %v81 = vmul.f32 %v79, 5.656854
    %v82 = vmul.f32 %v80, 5.656854
    %vm83 = vcmask 261120
    %84 = vst.msk [vmem:[#allocation5] sm:$0xff] %vm83, %v81
    %85 = vst.msk [vmem:[#allocation5 + $0x8] sm:$0xff] %vm83, %v82
    // Predicated region
    $region46: #{tpu_custom_call.1} parent=1 // pred_check
      _
    $region47: #{tpu_custom_call.1} parent=1 // pred_check_branch
      %87 = sbr.rel (0) target = $region49
    $region48: #{tpu_custom_call.1} parent=1 // pred_region
      %s89 = ssub.s32 256, 256
      %90 = vsyncadd [#allocation6], %s89
      %s91 = sshll.u32 [#allocation5], 4
      %s92 = int_to_ptr.vmem [resolvable:$true] %s91
      %97 = dma.vmem_to_hbm [thread:$0]  %s92, 256, %s2, [#allocation6], 128, 128, 8
    $region49: #{tpu_custom_call.1} parent=1 // pred_fallthru
      _
    // Predicated region
    $region50: #{tpu_custom_call.1} parent=1 // pred_check
      _
    $region51: #{tpu_custom_call.1} parent=1 // pred_check_branch
      %99 = sbr.rel (0) target = $region53
    $region52: #{tpu_custom_call.1} parent=1 // pred_region
      %100 = dma.done [#allocation6], 256
    $region53: #{tpu_custom_call.1} parent=1 // pred_fallthru
      _
    %101 = vsyncpa [#allocation6], 1
  %102 = vsyncmov [#allocation2]
  %s103 = vpop.sfrf %102
  %p104 = scmp.eq.s32.totalorder %s103, 0
  %p105 = pneg %p104
  %107 = shalt.err (%p105)

</llo_original>
